<compile_context>
chip_gen: v7x
topology: tpu7x:2x2x1
jax: 0.10.0
libtpu: 0.0.40
codegen_flags: <defaults>
</compile_context>

<pallas_src>
import functools

import jax
import jax.numpy as jnp
from jax.experimental import pallas as pl
from jax.experimental.pallas import tpu as pltpu

FIELD_DIMS = (5, 7, 11, 13)   # small synthetic vocab per field
NUM_FIELDS = len(FIELD_DIMS)
EMBED_DIM = 32
BATCH = 256                   # >= 2 grid steps so pipelining / megacore engage
TB = 128                      # batch tile (lane dim of every block); 256+ for v5e/v6e


def _round_up(v, m):
    return ((v + m - 1) // m) * m


def ffm_kernel(idx_ref, tbl_ref, out_ref, *, num_fields, embed_dim, total_pad):
    """idx_ref: (F, TB) int32 global token ids (batch on lanes).
    tbl_ref: (C_pad, total_pad) f32 resident table; row f*D+d = ffm_w[f, :, d],
             row F*D = linear weights (+ bias folded into field-0 tokens).
    out_ref: (1, TB) f32 sigmoid(logits), batch on lanes."""
    F, D = num_fields, embed_dim
    tb = out_ref.shape[-1]

    idx = idx_ref[...]                                   # (F, TB) int32
    tbl = tbl_ref[...]                                   # (C_pad, total_pad) f32
    iota_tok = jax.lax.broadcasted_iota(jnp.int32, (total_pad, tb), 0)

    # One-hot MXU gather per field: g_f[r, b] = tbl[r, idx[b, f]].
    gathered = []
    lin = jnp.zeros((1, tb), jnp.float32)
    for f in range(F):
        ids = idx[f:f + 1, :]                            # (1, TB)
        onehot = (iota_tok == ids).astype(jnp.float32)   # (total_pad, TB)  VPU
        g = jnp.dot(tbl, onehot,
                    preferred_element_type=jnp.float32)  # (C_pad, TB)      MXU
        gathered.append(g)
        lin = lin + g[F * D:F * D + 1, :]                # linear-weight row

    # FFM pair interactions: acc[d, b] = sum_{i<j} V_j[x_i,d] * V_i[x_j,d].
    acc = jnp.zeros((D, tb), jnp.float32)
    for i in range(F - 1):
        for j in range(i + 1, F):
            a = gathered[i][j * D:(j + 1) * D, :]        # V_j[x_i]  (D, TB)
            b = gathered[j][i * D:(i + 1) * D, :]        # V_i[x_j]  (D, TB)
            acc = acc + a * b                            # VPU

    ffm = jnp.sum(acc, axis=0, keepdims=True)            # (1, TB) single reduce
    out_ref[...] = jax.nn.sigmoid(ffm + lin)             # EUP + lane-dense store


def prepare_ffm_table(lin_w, lin_b, ffm_w, field_dims):
    """One-time parameter prep (hoisted out of the per-call path):
    pack all field tables + linear weights into one (C_pad, total_pad) slab,
    rows sublane-aligned, columns lane-aligned, bias folded into field 0."""
    F, total, D = ffm_w.shape
    C = F * D + 1
    c_pad = _round_up(C, 8)
    total_pad = max(_round_up(total, 128), 128)

    ffm_rows = jnp.swapaxes(ffm_w, 1, 2).reshape(F * D, total).astype(jnp.float32)
    lin_col = lin_w[:, 0].astype(jnp.float32)
    # Fold global bias into field 0's linear entries: gathered exactly once/sample.
    lin_col = lin_col.at[: field_dims[0]].add(lin_b[0])

    tbl = jnp.zeros((c_pad, total_pad), jnp.float32)
    tbl = tbl.at[:F * D, :total].set(ffm_rows)
    tbl = tbl.at[F * D, :total].set(lin_col)
    return tbl


@functools.partial(jax.jit, static_argnames=("field_dims", "embed_dim", "tb"))
def ffm_forward(x, tbl, *, field_dims, embed_dim, tb=TB):
    """x: (B, F) int32 per-field indices; tbl: prepared table from prepare_ffm_table."""
    B, F = x.shape
    c_pad, total_pad = tbl.shape

    # Per-field offsets are static Python constants.
    offs, s = [], 0
    for d in field_dims:
        offs.append(s)
        s += d
    offsets = jnp.asarray(offs, dtype=jnp.int32)

    idx_t = x.T + offsets[:, None]                       # (F, B) int32, batch on lanes
    b_pad = _round_up(B, tb)
    if b_pad != B:
        idx_t = jnp.pad(idx_t, ((0, 0), (0, b_pad - B)))

    kernel = functools.partial(
        ffm_kernel, num_fields=F, embed_dim=embed_dim, total_pad=total_pad)

    out = pl.pallas_call(
        kernel,
        out_shape=jax.ShapeDtypeStruct((1, b_pad), jnp.float32),
        grid_spec=pltpu.PrefetchScalarGridSpec(
            num_scalar_prefetch=0,
            grid=(b_pad // tb,),
            in_specs=[
                pl.BlockSpec((F, tb), lambda b: (0, b)),          # indices per tile
                pl.BlockSpec((c_pad, total_pad), lambda b: (0, 0)),  # resident table
            ],
            out_specs=pl.BlockSpec((1, tb), lambda b: (0, b)),
        ),
        compiler_params=pltpu.CompilerParams(
            dimension_semantics=("parallel",)   # batch tiles shard across v7x TCs
        ),
    )(idx_t, tbl)
    return out[0, :B]                                    # (B,)


def ffm_reference(x, lin_w, lin_b, ffm_w, field_dims):
    """Pure-JAX reference mirroring the PyTorch module semantics."""
    field_dims_arr = jnp.asarray(field_dims, dtype=jnp.int32)
    offsets = jnp.concatenate(
        [jnp.zeros((1,), jnp.int32), jnp.cumsum(field_dims_arr)[:-1]])
    idx = x + offsets[None, :]
    F = len(field_dims)
    xs = [ffm_w[t][idx] for t in range(F)]               # each (B, F, D)
    prods = []
    for i in range(F - 1):
        for j in range(i + 1, F):
            prods.append(xs[j][:, i] * xs[i][:, j])
    ix = jnp.stack(prods, axis=1)                        # (B, P, D)
    ffm_term = jnp.sum(jnp.sum(ix, axis=1), axis=1, keepdims=True)   # (B, 1)
    lin = jnp.sum(lin_w[idx], axis=1) + lin_b            # (B, 1)
    return jax.nn.sigmoid((lin + ffm_term)[:, 0])


if __name__ == "__main__":
    key = jax.random.PRNGKey(0)
    k_x, k_lin, k_ffm = jax.random.split(key, 3)

    total = sum(FIELD_DIMS)
    lin_w = 0.01 * jax.random.normal(k_lin, (total, 1), dtype=jnp.float32)
    lin_b = jnp.zeros((1,), dtype=jnp.float32)
    ffm_w = 0.1 * jax.random.normal(
        k_ffm, (NUM_FIELDS, total, EMBED_DIM), dtype=jnp.float32)

    x = jax.random.randint(
        k_x, (BATCH, NUM_FIELDS), 0, jnp.asarray(FIELD_DIMS, jnp.int32),
        dtype=jnp.int32)

    # One-time parameter packing (outside the per-call path).
    tbl = prepare_ffm_table(lin_w, lin_b, ffm_w, FIELD_DIMS)

    out = ffm_forward(x, tbl, field_dims=FIELD_DIMS, embed_dim=EMBED_DIM, tb=TB)
    out = jax.block_until_ready(out)

    ref = ffm_reference(x, lin_w, lin_b, ffm_w, FIELD_DIMS)
    assert out.shape == (BATCH,)
    # Tolerance covers a possible default-precision (bf16-pass) MXU gather; the
    # rest of the arithmetic (products, sums, sigmoid) stays in f32.
    assert jnp.allclose(out, ref, atol=2e-3, rtol=1e-3), (out, ref)

    print("KERNEL_OK")
</pallas_src>

<mosaic_0001>
module attributes {stable_mosaic.version = 11 : i64} {
  func.func @ffm_kernel(%arg0: i32, %arg1: memref<4x128xi32, #tpu.memory_space<vmem>>, %arg2: memref<136x128xf32, #tpu.memory_space<vmem>>, %arg3: memref<1x128xf32, #tpu.memory_space<vmem>>) attributes {dimension_semantics = [#tpu.dimension_semantics<parallel>], iteration_bounds = array<i64: 2>, scalar_prefetch = 0 : i64, scratch_operands = 0 : i64, tpu.core_type = #tpu.core_type<tc>, window_params = [{transform_indices = @transform_0, window_bounds = array<i64: 4, 128>}, {pipeline_mode = #tpu.pipeline_mode<synchronous>, transform_indices = @transform_1, window_bounds = array<i64: 136, 128>}, {transform_indices = @transform_2, window_bounds = array<i64: 1, 128>}]} {
    %c0 = arith.constant 0 : index
    %c0_0 = arith.constant 0 : index
    %0 = vector.load %arg1[%c0, %c0_0] : memref<4x128xi32, #tpu.memory_space<vmem>>, vector<4x128xi32>
    %c0_1 = arith.constant 0 : index
    %c0_2 = arith.constant 0 : index
    %1 = vector.load %arg2[%c0_1, %c0_2] : memref<136x128xf32, #tpu.memory_space<vmem>>, vector<136x128xf32>
    %2 = tpu.iota {dimensions = array<i32: 0>} : vector<128x128xi32>
    %cst = arith.constant 0.000000e+00 : f32
    %3 = vector.broadcast %cst : f32 to vector<1x128xf32>
    %4 = vector.extract_strided_slice %0 {offsets = [0, 0], sizes = [1, 128], strides = [1, 1]} : vector<4x128xi32> to vector<1x128xi32>
    %5 = vector.broadcast %4 : vector<1x128xi32> to vector<128x128xi32>
    %6 = arith.cmpi eq, %2, %5 : vector<128x128xi32>
    %7 = arith.extui %6 : vector<128x128xi1> to vector<128x128xi32>
    %8 = arith.sitofp %7 : vector<128x128xi32> to vector<128x128xf32>
    %cst_3 = arith.constant dense<0.000000e+00> : vector<136x128xf32>
    %9 = tpu.matmul %1, %8, %cst_3 {dimension_numbers = #tpu.dot_dimension_numbers<[1], [0], [0], [1], [0, 0, 1, 1], [], []>} : vector<136x128xf32>, vector<128x128xf32>, vector<136x128xf32> -> vector<136x128xf32>
    %10 = vector.extract_strided_slice %9 {offsets = [128, 0], sizes = [1, 128], strides = [1, 1]} : vector<136x128xf32> to vector<1x128xf32>
    %11 = arith.addf %3, %10 : vector<1x128xf32>
    %12 = vector.extract_strided_slice %0 {offsets = [1, 0], sizes = [1, 128], strides = [1, 1]} : vector<4x128xi32> to vector<1x128xi32>
    %13 = vector.broadcast %12 : vector<1x128xi32> to vector<128x128xi32>
    %14 = arith.cmpi eq, %2, %13 : vector<128x128xi32>
    %15 = arith.extui %14 : vector<128x128xi1> to vector<128x128xi32>
    %16 = arith.sitofp %15 : vector<128x128xi32> to vector<128x128xf32>
    %cst_4 = arith.constant dense<0.000000e+00> : vector<136x128xf32>
    %17 = tpu.matmul %1, %16, %cst_4 {dimension_numbers = #tpu.dot_dimension_numbers<[1], [0], [0], [1], [0, 0, 1, 1], [], []>} : vector<136x128xf32>, vector<128x128xf32>, vector<136x128xf32> -> vector<136x128xf32>
    %18 = vector.extract_strided_slice %17 {offsets = [128, 0], sizes = [1, 128], strides = [1, 1]} : vector<136x128xf32> to vector<1x128xf32>
    %19 = arith.addf %11, %18 : vector<1x128xf32>
    %20 = vector.extract_strided_slice %0 {offsets = [2, 0], sizes = [1, 128], strides = [1, 1]} : vector<4x128xi32> to vector<1x128xi32>
    %21 = vector.broadcast %20 : vector<1x128xi32> to vector<128x128xi32>
    %22 = arith.cmpi eq, %2, %21 : vector<128x128xi32>
    %23 = arith.extui %22 : vector<128x128xi1> to vector<128x128xi32>
    %24 = arith.sitofp %23 : vector<128x128xi32> to vector<128x128xf32>
    %cst_5 = arith.constant dense<0.000000e+00> : vector<136x128xf32>
    %25 = tpu.matmul %1, %24, %cst_5 {dimension_numbers = #tpu.dot_dimension_numbers<[1], [0], [0], [1], [0, 0, 1, 1], [], []>} : vector<136x128xf32>, vector<128x128xf32>, vector<136x128xf32> -> vector<136x128xf32>
    %26 = vector.extract_strided_slice %25 {offsets = [128, 0], sizes = [1, 128], strides = [1, 1]} : vector<136x128xf32> to vector<1x128xf32>
    %27 = arith.addf %19, %26 : vector<1x128xf32>
    %28 = vector.extract_strided_slice %0 {offsets = [3, 0], sizes = [1, 128], strides = [1, 1]} : vector<4x128xi32> to vector<1x128xi32>
    %29 = vector.broadcast %28 : vector<1x128xi32> to vector<128x128xi32>
    %30 = arith.cmpi eq, %2, %29 : vector<128x128xi32>
    %31 = arith.extui %30 : vector<128x128xi1> to vector<128x128xi32>
    %32 = arith.sitofp %31 : vector<128x128xi32> to vector<128x128xf32>
    %cst_6 = arith.constant dense<0.000000e+00> : vector<136x128xf32>
    %33 = tpu.matmul %1, %32, %cst_6 {dimension_numbers = #tpu.dot_dimension_numbers<[1], [0], [0], [1], [0, 0, 1, 1], [], []>} : vector<136x128xf32>, vector<128x128xf32>, vector<136x128xf32> -> vector<136x128xf32>
    %34 = vector.extract_strided_slice %33 {offsets = [128, 0], sizes = [1, 128], strides = [1, 1]} : vector<136x128xf32> to vector<1x128xf32>
    %35 = arith.addf %27, %34 : vector<1x128xf32>
    %cst_7 = arith.constant 0.000000e+00 : f32
    %36 = vector.broadcast %cst_7 : f32 to vector<32x128xf32>
    %37 = vector.extract_strided_slice %9 {offsets = [32, 0], sizes = [32, 128], strides = [1, 1]} : vector<136x128xf32> to vector<32x128xf32>
    %38 = vector.extract_strided_slice %17 {offsets = [0, 0], sizes = [32, 128], strides = [1, 1]} : vector<136x128xf32> to vector<32x128xf32>
    %39 = arith.mulf %37, %38 : vector<32x128xf32>
    %40 = arith.addf %36, %39 : vector<32x128xf32>
    %41 = vector.extract_strided_slice %9 {offsets = [64, 0], sizes = [32, 128], strides = [1, 1]} : vector<136x128xf32> to vector<32x128xf32>
    %42 = vector.extract_strided_slice %25 {offsets = [0, 0], sizes = [32, 128], strides = [1, 1]} : vector<136x128xf32> to vector<32x128xf32>
    %43 = arith.mulf %41, %42 : vector<32x128xf32>
    %44 = arith.addf %40, %43 : vector<32x128xf32>
    %45 = vector.extract_strided_slice %9 {offsets = [96, 0], sizes = [32, 128], strides = [1, 1]} : vector<136x128xf32> to vector<32x128xf32>
    %46 = vector.extract_strided_slice %33 {offsets = [0, 0], sizes = [32, 128], strides = [1, 1]} : vector<136x128xf32> to vector<32x128xf32>
    %47 = arith.mulf %45, %46 : vector<32x128xf32>
    %48 = arith.addf %44, %47 : vector<32x128xf32>
    %49 = vector.extract_strided_slice %17 {offsets = [64, 0], sizes = [32, 128], strides = [1, 1]} : vector<136x128xf32> to vector<32x128xf32>
    %50 = vector.extract_strided_slice %25 {offsets = [32, 0], sizes = [32, 128], strides = [1, 1]} : vector<136x128xf32> to vector<32x128xf32>
    %51 = arith.mulf %49, %50 : vector<32x128xf32>
    %52 = arith.addf %48, %51 : vector<32x128xf32>
    %53 = vector.extract_strided_slice %17 {offsets = [96, 0], sizes = [32, 128], strides = [1, 1]} : vector<136x128xf32> to vector<32x128xf32>
    %54 = vector.extract_strided_slice %33 {offsets = [32, 0], sizes = [32, 128], strides = [1, 1]} : vector<136x128xf32> to vector<32x128xf32>
    %55 = arith.mulf %53, %54 : vector<32x128xf32>
    %56 = arith.addf %52, %55 : vector<32x128xf32>
    %57 = vector.extract_strided_slice %25 {offsets = [96, 0], sizes = [32, 128], strides = [1, 1]} : vector<136x128xf32> to vector<32x128xf32>
    %58 = vector.extract_strided_slice %33 {offsets = [64, 0], sizes = [32, 128], strides = [1, 1]} : vector<136x128xf32> to vector<32x128xf32>
    %59 = arith.mulf %57, %58 : vector<32x128xf32>
    %60 = arith.addf %56, %59 : vector<32x128xf32>
    %cst_8 = arith.constant dense<0.000000e+00> : vector<128xf32>
    %61 = vector.multi_reduction <add>, %60, %cst_8 [0] : vector<32x128xf32> to vector<128xf32>
    %62 = vector.shape_cast %61 : vector<128xf32> to vector<1x128xf32>
    %63 = arith.addf %62, %35 : vector<1x128xf32>
    %64 = arith.negf %63 : vector<1x128xf32>
    %65 = math.exp %64 : vector<1x128xf32>
    %cst_9 = arith.constant 1.000000e+00 : f32
    %66 = vector.broadcast %cst_9 : f32 to vector<1x128xf32>
    %67 = arith.addf %66, %65 : vector<1x128xf32>
    %68 = arith.divf %66, %67 : vector<1x128xf32>
    %c0_10 = arith.constant 0 : index
    %c0_11 = arith.constant 0 : index
    %69 = vector.load %arg3[%c0_10, %c0_11] : memref<1x128xf32, #tpu.memory_space<vmem>>, vector<1x128xf32>
    tpu.vector_store %arg3[%c0_10, %c0_11], %68 {strides = array<i32>} : memref<1x128xf32, #tpu.memory_space<vmem>>, vector<1x128xf32>,
    return
  }
  func.func @transform_0(%arg0: i32) -> (i32, i32) {
    %c0_i32 = arith.constant 0 : i32
    %c0_i32_0 = arith.constant 0 : i32
    return %c0_i32, %arg0 : i32, i32
  }
  func.func @transform_1(%arg0: i32) -> (i32, i32) {
    %c0_i32 = arith.constant 0 : i32
    %c0_i32_0 = arith.constant 0 : i32
    %c0_i32_1 = arith.constant 0 : i32
    return %c0_i32, %c0_i32_0 : i32, i32
  }
  func.func @transform_2(%arg0: i32) -> (i32, i32) {
    %c0_i32 = arith.constant 0 : i32
    %c0_i32_0 = arith.constant 0 : i32
    return %c0_i32, %arg0 : i32, i32
  }
}

</mosaic_0001>

<llo_original>
// kernel: ffm_forward.1
$region0: #{ffm_forward.1}
  #allocation0 [shape = 'u32[]', space=smem, size = 0x4, offset = 0x4, fixed_abs, tag = 'smem constant byte address 0x4 - core index']
  #allocation1 [shape = 'u32[144,128]{1,0:T(1,128)}', space=vmem, size = 0x12000, scoped, tag = 'internal scratch']
  %s0 = inlined_call_operand.vmem [shape: s32[4,256], index: 0, kind: input, shape index: {}]
  %s1 = inlined_call_operand.hbm [shape: f32[136,128], index: 1, kind: input, shape index: {}]
  %s2 = inlined_call_operand.hbm [shape: f32[1,256], index: 2, kind: output, shape index: {}]
  %s3 = sld [smem:[#allocation0]]
  $region45: #{ffm_forward.1} parent=0
    _
  %s5 = ssub.s32 1, %s3
  %s6 = scalar_select 0, %s5, %s3
  $region1: #{ffm_forward.1} parent=0
    #allocation2 [shape = 'u8[69632]{0}', space=vmem, size = 0x11000, scoped, tag = 'input window, operand 1, single buffered']
    #allocation3 [shape = 's32[2]{0}', space=sflag, size = 0x8, scoped, tag = 'scoped memory for ffm_forward.1']
    #allocation4 [shape = 's32[2]{0}', space=sflag, size = 0x8, scoped, tag = 'scoped memory for ffm_forward.1']
    #allocation5 [shape = 'u8[1024]{0}', space=vmem, size = 0x400, scoped, tag = 'output window, operand 0']
    %7 = vsyncpa [#allocation3], 0
    %8 = vsyncpa [#allocation4], 0
    %s9 = scalar_lea.sflag [#allocation4], 1
    %10 = vsyncpa %s9, 0
    loop: start=0, step=1, limit=4
    $region2: #{ffm_forward.1} parent=1 // loop_pre_header
      _
    $region3: #{ffm_forward.1} parent=1 // loop_header
      %s12 = sphi 0, %s16
      %p13 = scmp.ge.s32.totalorder %s12, 4
      %s22 = sphi 0, %s24
      %s25 = sphi 0, %s22
      %s26 = sphi 0, %s25
      %s42 = sphi 0, %s26
      %s46 = sphi 0, %s46
      %s48 = sphi 0, %s46
      %s49 = sphi 0, %s48
      %s63 = sphi 0, %s49
      %s69 = sphi 0, %s71
      %s72 = sphi 0, %s69
      %s73 = sphi 0, %s72
      %s89 = sphi 0, %s73
    $region4: #{ffm_forward.1} parent=1 // loop_header_branch
      %15 = sbr.rel (%p13) target = $region8
    $region5: #{ffm_forward.1} parent=1 // loop_body
      %s17 = ssub.s32 %s12, 1
      %s18 = ssub.s32 %s12, 2
      %s19 = sadd.s32 %s12, 1
      %s20 = ssub.s32 %s12, %s19
      %p21 = scmp.eq.s32.totalorder %s20, 0
      %s23 = sadd.s32 %s22, 1
      %s24 = scalar_select %p21, %s22, %s23
      %p27 = pneg %p21
      %p28 = scmp.eq.s32.totalorder %s12, 1
      %p29 = por %p27, %p28
      %p30 = scmp.ne.s32.totalorder %s22, %s25
      %p31 = scmp.eq.s32.totalorder %s12, 0
      %p32 = por %p30, %p31
      %p33 = scmp.ne.s32.totalorder %s22, %s25
      %p34 = scmp.eq.s32.totalorder %s17, 1
      %p35 = por %p33, %p34
      %p36 = scmp.ne.s32.totalorder %s25, %s26
      %p37 = scmp.eq.s32.totalorder %s17, 0
      %p38 = por %p36, %p37
      %p39 = scmp.ne.s32.totalorder %s25, %s26
      %p40 = scmp.eq.s32.totalorder %s18, 1
      %p41 = por %p39, %p40
      %p43 = scmp.ne.s32.totalorder %s26, %s42
      %p44 = scmp.eq.s32.totalorder %s18, 0
      %p45 = por %p43, %p44
      %s47 = sadd.s32 %s46, 1
      %p50 = scmp.eq.s32.totalorder %s12, 1
      %p51 = scmp.ne.s32.totalorder %s46, %s48
      %p52 = scmp.eq.s32.totalorder %s12, 0
      %p53 = por %p51, %p52
      %p54 = scmp.ne.s32.totalorder %s46, %s48
      %p55 = scmp.eq.s32.totalorder %s17, 1
      %p56 = por %p54, %p55
      %p57 = scmp.ne.s32.totalorder %s48, %s49
      %p58 = scmp.eq.s32.totalorder %s17, 0
      %p59 = por %p57, %p58
      %p60 = scmp.ne.s32.totalorder %s48, %s49
      %p61 = scmp.eq.s32.totalorder %s18, 1
      %p62 = por %p60, %p61
      %p64 = scmp.ne.s32.totalorder %s49, %s63
      %p65 = scmp.eq.s32.totalorder %s18, 0
      %p66 = por %p64, %p65
      %s67 = ssub.s32 %s12, %s19
      %p68 = scmp.eq.s32.totalorder %s67, 0
      %s70 = sadd.s32 %s69, 1
      %s71 = scalar_select %p68, %s69, %s70
      %p74 = pneg %p68
      %p75 = scmp.eq.s32.totalorder %s12, 1
      %p76 = por %p74, %p75
      %p77 = scmp.ne.s32.totalorder %s69, %s72
      %p78 = scmp.eq.s32.totalorder %s12, 0
      %p79 = por %p77, %p78
      %p80 = scmp.ne.s32.totalorder %s69, %s72
      %p81 = scmp.eq.s32.totalorder %s17, 1
      %p82 = por %p80, %p81
      %p83 = scmp.ne.s32.totalorder %s72, %s73
      %p84 = scmp.eq.s32.totalorder %s17, 0
      %p85 = por %p83, %p84
      %p86 = scmp.ne.s32.totalorder %s72, %s73
      %p87 = scmp.eq.s32.totalorder %s18, 1
      %p88 = por %p86, %p87
      %p90 = scmp.ne.s32.totalorder %s73, %s89
      %p91 = scmp.eq.s32.totalorder %s18, 0
      %p92 = por %p90, %p91
      %p93 = scmp.le.s32.totalorder 1, %s12
      %p94 = scmp.lt.s32.totalorder %s12, 3
      %p95 = pnand %p93, %p94
      %p96 = pneg %p95
      // Predicated region
      $region9: #{ffm_forward.1} parent=5 // pred_check
        _
      $region10: #{ffm_forward.1} parent=5 // pred_check_branch
        %98 = sbr.rel (%p95) target = $region12
      $region11: #{ffm_forward.1} parent=5 // pred_region
        %s99 = ssub.s32 %s12, 1
        // Predicated region
        $region13: #{ffm_forward.1} parent=11 // pred_check
          %p100 = pneg %p59
        $region14: #{ffm_forward.1} parent=11 // pred_check_branch
          %102 = sbr.rel (%p100) target = $region16
        $region15: #{ffm_forward.1} parent=11 // pred_region
          %s104 = ssub.s32 2176, 2176
          %105 = vsyncadd [#allocation3], %s104
          %s106 = sshll.u32 [#allocation2], 4
          %s107 = int_to_ptr.vmem [resolvable:$true] %s106
          %112 = dma.hbm_to_vmem [thread:$0]  %s1, 2176, %s107, [#allocation3], 128, 128, 8
        $region16: #{ffm_forward.1} parent=11 // pred_fallthru
          _
      $region12: #{ffm_forward.1} parent=5 // pred_fallthru
        _
      %p113 = scmp.lt.s32.totalorder %s12, 2
      // Predicated region
      $region17: #{ffm_forward.1} parent=5 // pred_check
        %p114 = pneg %p113
      $region18: #{ffm_forward.1} parent=5 // pred_check_branch
        %116 = sbr.rel (%p114) target = $region20
      $region19: #{ffm_forward.1} parent=5 // pred_region
        // Predicated region
        $region21: #{ffm_forward.1} parent=19 // pred_check
          %p117 = pneg %p32
        $region22: #{ffm_forward.1} parent=19 // pred_check_branch
          %119 = sbr.rel (%p117) target = $region24
        $region23: #{ffm_forward.1} parent=19 // pred_region
          %p120 = scmp.lt.s32.totalorder %s12, 1
          %s121 = scalar_select %p120, %s12, 1
          %s122 = smul.addr %s121, 4
          %s123 = scalar_lea.vmem %s0, %s122
        $region24: #{ffm_forward.1} parent=19 // pred_fallthru
          _
      $region20: #{ffm_forward.1} parent=5 // pred_fallthru
        _
      %p124 = scmp.le.s32.totalorder 1, %s12
      %p125 = scmp.lt.s32.totalorder %s12, 3
      %p126 = pnand %p124, %p125
      %p127 = pneg %p126
      // Predicated region
      $region25: #{ffm_forward.1} parent=5 // pred_check
        _
      $region26: #{ffm_forward.1} parent=5 // pred_check_branch
        %129 = sbr.rel (%p126) target = $region28
      $region27: #{ffm_forward.1} parent=5 // pred_region
        %s130 = ssub.s32 %s12, 1
        // Predicated region
        $region29: #{ffm_forward.1} parent=27 // pred_check
          %p131 = pneg %p59
        $region30: #{ffm_forward.1} parent=27 // pred_check_branch
          %133 = sbr.rel (%p131) target = $region32
        $region31: #{ffm_forward.1} parent=27 // pred_region
          %134 = dma.done [#allocation3], 2176
        $region32: #{ffm_forward.1} parent=27 // pred_fallthru
          _
        %p135 = scmp.lt.s32.totalorder %s17, 1
        %s136 = scalar_select %p135, %s17, 1
        %s137 = smul.addr %s136, 4
        %s138 = scalar_lea.vmem %s0, %s137
        %p139 = pneg %p38
        %p140 = pneg %p35
        %p141 = pneg %p59
        %p142 = pneg %p56
        %p143 = pneg %p85
        %p144 = pneg %p82
        %s145 = sand.u32 %s72, 1
        %s146 = scalar_lea.sflag [#allocation4], %s145
        %s147 = sand.u32 %s72, 1
        %s148 = scalar_lea.vmem [#allocation5], %s147
        %p149 = scmp.lt.s32.totalorder %s17, 1
        %s150 = scalar_select %p149, %s17, 1
        %s151 = smul.addr %s150, 4
        %s152 = scalar_lea.vmem %s0, %s151
        %v153 = vld [vmem:[%s152] sm:$0xf]
        %v154 = vld [vmem:[#allocation2] sm:$0xff]
        %v155 = vld [vmem:[#allocation2 + $0x8] sm:$0xff]
        %v156 = vld [vmem:[#allocation2 + $0x10] sm:$0xff]
        %v157 = vld [vmem:[#allocation2 + $0x18] sm:$0xff]
        %v158 = vld [vmem:[#allocation2 + $0x20] sm:$0xff]
        %v159 = vld [vmem:[#allocation2 + $0x28] sm:$0xff]
        %v160 = vld [vmem:[#allocation2 + $0x30] sm:$0xff]
        %v161 = vld [vmem:[#allocation2 + $0x38] sm:$0xff]
        %v162 = vld [vmem:[#allocation2 + $0x40] sm:$0xff]
        %v163 = vld [vmem:[#allocation2 + $0x48] sm:$0xff]
        %v164 = vld [vmem:[#allocation2 + $0x50] sm:$0xff]
        %v165 = vld [vmem:[#allocation2 + $0x58] sm:$0xff]
        %v166 = vld [vmem:[#allocation2 + $0x60] sm:$0xff]
        %v167 = vld [vmem:[#allocation2 + $0x68] sm:$0xff]
        %v168 = vld [vmem:[#allocation2 + $0x70] sm:$0xff]
        %v169 = vld [vmem:[#allocation2 + $0x78] sm:$0xff]
        %v170 = vld [vmem:[#allocation2 + $0x80] sm:$0xff]
        %v171 = vlaneseq
        %v172 = vshrl.u32 %v171, 7
        %v173 = vadd.s32 %v172, 8
        %v174 = vadd.s32 %v172, 16
        %v175 = vadd.s32 %v172, 24
        %v176 = vadd.s32 %v172, 32
        %v177 = vadd.s32 %v172, 40
        %v178 = vadd.s32 %v172, 48
        %v179 = vadd.s32 %v172, 56
        %v180 = vadd.s32 %v172, 64
        %v181 = vadd.s32 %v172, 72
        %v182 = vadd.s32 %v172, 80
        %v183 = vadd.s32 %v172, 88
        %v184 = vadd.s32 %v172, 96
        %v185 = vadd.s32 %v172, 104
        %v186 = vadd.s32 %v172, 112
        %v187 = vadd.s32 %v172, 120
        %v188 = vlaneseq
        %v189 = vshrl.u32 %v188, 7
        %v190 = vsub.s32 0, %v189
        %v191 = vrot.slane %v153, %v190
        %vm192 = vcmp.eq.s32.totalorder %v172, %v191
        %vm193 = vcmp.eq.s32.totalorder %v173, %v191
        %vm194 = vcmp.eq.s32.totalorder %v174, %v191
        %vm195 = vcmp.eq.s32.totalorder %v175, %v191
        %vm196 = vcmp.eq.s32.totalorder %v176, %v191
        %vm197 = vcmp.eq.s32.totalorder %v177, %v191
        %vm198 = vcmp.eq.s32.totalorder %v178, %v191
        %vm199 = vcmp.eq.s32.totalorder %v179, %v191
        %vm200 = vcmp.eq.s32.totalorder %v180, %v191
        %vm201 = vcmp.eq.s32.totalorder %v181, %v191
        %vm202 = vcmp.eq.s32.totalorder %v182, %v191
        %vm203 = vcmp.eq.s32.totalorder %v183, %v191
        %vm204 = vcmp.eq.s32.totalorder %v184, %v191
        %vm205 = vcmp.eq.s32.totalorder %v185, %v191
        %vm206 = vcmp.eq.s32.totalorder %v186, %v191
        %vm207 = vcmp.eq.s32.totalorder %v187, %v191
        %v208 = vsel %vm192, 1, 0
        %v209 = vsel %vm193, 1, 0
        %v210 = vsel %vm194, 1, 0
        %v211 = vsel %vm195, 1, 0
        %v212 = vsel %vm196, 1, 0
        %v213 = vsel %vm197, 1, 0
        %v214 = vsel %vm198, 1, 0
        %v215 = vsel %vm199, 1, 0
        %v216 = vsel %vm200, 1, 0
        %v217 = vsel %vm201, 1, 0
        %v218 = vsel %vm202, 1, 0
        %v219 = vsel %vm203, 1, 0
        %v220 = vsel %vm204, 1, 0
        %v221 = vsel %vm205, 1, 0
        %v222 = vsel %vm206, 1, 0
        %v223 = vsel %vm207, 1, 0
        %v224 = vcvt.s32.f32 %v208
        %v225 = vcvt.s32.f32 %v209
        %v226 = vcvt.s32.f32 %v210
        %v227 = vcvt.s32.f32 %v211
        %v228 = vcvt.s32.f32 %v212
        %v229 = vcvt.s32.f32 %v213
        %v230 = vcvt.s32.f32 %v214
        %v231 = vcvt.s32.f32 %v215
        %v232 = vcvt.s32.f32 %v216
        %v233 = vcvt.s32.f32 %v217
        %v234 = vcvt.s32.f32 %v218
        %v235 = vcvt.s32.f32 %v219
        %v236 = vcvt.s32.f32 %v220
        %v237 = vcvt.s32.f32 %v221
        %v238 = vcvt.s32.f32 %v222
        %v239 = vcvt.s32.f32 %v223
        %240 = vmatprep.subr.mxu0 0.0
        %241 = vmatpush1.msra.mxu0 %v224
        %242 = vmatprep.subr.mxu0 0.0
        %243 = vmatpush1.msra.mxu0 %v225
        %244 = vmatprep.subr.mxu0 0.0
        %245 = vmatpush1.msra.mxu0 %v226
        %246 = vmatprep.subr.mxu0 0.0
        %247 = vmatpush1.msra.mxu0 %v227
        %248 = vmatprep.subr.mxu0 0.0
        %249 = vmatpush1.msra.mxu0 %v228
        %250 = vmatprep.subr.mxu0 0.0
        %251 = vmatpush1.msra.mxu0 %v229
        %252 = vmatprep.subr.mxu0 0.0
        %253 = vmatpush1.msra.mxu0 %v230
        %254 = vmatprep.subr.mxu0 0.0
        %255 = vmatpush1.msra.mxu0 %v231
        %256 = vmatprep.subr.mxu0 0.0
        %257 = vmatpush1.msra.mxu0 %v232
        %258 = vmatprep.subr.mxu0 0.0
        %259 = vmatpush1.msra.mxu0 %v233
        %260 = vmatprep.subr.mxu0 0.0
        %261 = vmatpush1.msra.mxu0 %v234
        %262 = vmatprep.subr.mxu0 0.0
        %263 = vmatpush1.msra.mxu0 %v235
        %264 = vmatprep.subr.mxu0 0.0
        %265 = vmatpush1.msra.mxu0 %v236
        %266 = vmatprep.subr.mxu0 0.0
        %267 = vmatpush1.msra.mxu0 %v237
        %268 = vmatprep.subr.mxu0 0.0
        %269 = vmatpush1.msra.mxu0 %v238
        %270 = vmatprep.subr.mxu0 0.0
        %271 = vmatpush1.msra.mxu0 %v239
        %272 = vmatprep.subr.mxu0 0.0
        %273 = vmatpush1.msra.mxu0 0.0
        %274 = vmatprep.subr.mxu0 0.0
        %275 = vmatpush1.msra.mxu0 0.0
        %276 = vmatprep.subr.mxu0 0.0
        %277 = vmatpush1.msra.mxu0 0.0
        %278 = vmatprep.subr.mxu0 0.0
        %279 = vmatpush1.msra.mxu0 0.0
        %280 = vmatprep.subr.mxu0 0.0
        %281 = vmatpush1.msra.mxu0 0.0
        %282 = vmatprep.subr.mxu0 0.0
        %283 = vmatpush1.msra.mxu0 0.0
        %284 = vmatprep.subr.mxu0 0.0
        %285 = vmatpush1.msra.mxu0 0.0
        %286 = vmatprep.subr.mxu0 0.0
        %287 = vmatpush1.msra.mxu0 0.0
        %288 = vmatprep.subr.mxu0 0.0
        %289 = vmatpush1.msra.mxu0 0.0
        %290 = vmatprep.subr.mxu0 0.0
        %291 = vmatpush1.msra.mxu0 0.0
        %292 = vmatprep.subr.mxu0 0.0
        %293 = vmatpush1.msra.mxu0 0.0
        %294 = vmatprep.subr.mxu0 0.0
        %295 = vmatpush1.msra.mxu0 0.0
        %296 = vmatprep.subr.mxu0 0.0
        %297 = vmatpush1.msra.mxu0 0.0
        %298 = vmatprep.subr.mxu0 0.0
        %299 = vmatpush1.msra.mxu0 0.0
        %300 = vmatprep.subr.mxu0 0.0
        %301 = vmatpush1.msra.mxu0 0.0
        %302 = vmatprep.subr.mxu0 0.0
        %303 = vmatpush1.msra.mxu0 0.0
        %304 = vmatprep.mubr.f32.mxu0 0.0
        %305 = vmatmul.mubr.f32.gmra.mrb[0].mxu0 %v154
        %v306 = vpop.f32.mrb[0].mxu0
        %v307 = vpop.f32.mrb[0].mxu0
        %308 = vmatprep.mubr.f32.mxu0 0.0
        %309 = vmatmul.mubr.f32.gmra.mrb[0].mxu0 %v155
        %v310 = vpop.f32.mrb[0].mxu0
        %v311 = vpop.f32.mrb[0].mxu0
        %312 = vmatprep.mubr.f32.mxu0 0.0
        %313 = vmatmul.mubr.f32.gmra.mrb[0].mxu0 %v156
        %v314 = vpop.f32.mrb[0].mxu0
        %v315 = vpop.f32.mrb[0].mxu0
        %316 = vmatprep.mubr.f32.mxu0 0.0
        %317 = vmatmul.mubr.f32.gmra.mrb[0].mxu0 %v157
        %v318 = vpop.f32.mrb[0].mxu0
        %v319 = vpop.f32.mrb[0].mxu0
        %320 = vmatprep.mubr.f32.mxu0 0.0
        %321 = vmatmul.mubr.f32.gmra.mrb[0].mxu0 %v158
        %v322 = vpop.f32.mrb[0].mxu0
        %v323 = vadd.f32 0.0, %v322
        %v324 = vpop.f32.mrb[0].mxu0
        %325 = vmatprep.mubr.f32.mxu0 0.0
        %326 = vmatmul.mubr.f32.gmra.mrb[0].mxu0 %v159
        %v327 = vpop.f32.mrb[0].mxu0
        %v328 = vadd.f32 0.0, %v327
        %v329 = vpop.f32.mrb[0].mxu0
        %330 = vmatprep.mubr.f32.mxu0 0.0
        %331 = vmatmul.mubr.f32.gmra.mrb[0].mxu0 %v160
        %v332 = vpop.f32.mrb[0].mxu0
        %v333 = vadd.f32 0.0, %v332
        %v334 = vpop.f32.mrb[0].mxu0
        %335 = vmatprep.mubr.f32.mxu0 0.0
        %336 = vmatmul.mubr.f32.gmra.mrb[0].mxu0 %v161
        %v337 = vpop.f32.mrb[0].mxu0
        %v338 = vadd.f32 0.0, %v337
        %v339 = vpop.f32.mrb[0].mxu0
        %340 = vmatprep.mubr.f32.mxu0 0.0
        %341 = vmatmul.mubr.f32.gmra.mrb[0].mxu0 %v162
        %v342 = vpop.f32.mrb[0].mxu0
        %v343 = vadd.f32 0.0, %v342
        %v344 = vpop.f32.mrb[0].mxu0
        %345 = vmatprep.mubr.f32.mxu0 0.0
        %346 = vmatmul.mubr.f32.gmra.mrb[0].mxu0 %v163
        %v347 = vpop.f32.mrb[0].mxu0
        %v348 = vadd.f32 0.0, %v347
        %v349 = vpop.f32.mrb[0].mxu0
        %350 = vmatprep.mubr.f32.mxu0 0.0
        %351 = vmatmul.mubr.f32.gmra.mrb[0].mxu0 %v164
        %v352 = vpop.f32.mrb[0].mxu0
        %v353 = vadd.f32 0.0, %v352
        %v354 = vpop.f32.mrb[0].mxu0
        %355 = vmatprep.mubr.f32.mxu0 0.0
        %356 = vmatmul.mubr.f32.gmra.mrb[0].mxu0 %v165
        %v357 = vpop.f32.mrb[0].mxu0
        %v358 = vadd.f32 0.0, %v357
        %v359 = vpop.f32.mrb[0].mxu0
        %360 = vmatprep.mubr.f32.mxu0 0.0
        %361 = vmatmul.mubr.f32.gmra.mrb[0].mxu0 %v166
        %v362 = vpop.f32.mrb[0].mxu0
        %v363 = vadd.f32 0.0, %v362
        %v364 = vpop.f32.mrb[0].mxu0
        %365 = vmatprep.mubr.f32.mxu0 0.0
        %366 = vmatmul.mubr.f32.gmra.mrb[0].mxu0 %v167
        %v367 = vpop.f32.mrb[0].mxu0
        %v368 = vadd.f32 0.0, %v367
        %v369 = vpop.f32.mrb[0].mxu0
        %370 = vmatprep.mubr.f32.mxu0 0.0
        %371 = vmatmul.mubr.f32.gmra.mrb[0].mxu0 %v168
        %v372 = vpop.f32.mrb[0].mxu0
        %v373 = vadd.f32 0.0, %v372
        %v374 = vpop.f32.mrb[0].mxu0
        %375 = vmatprep.mubr.f32.mxu0 0.0
        %376 = vmatmul.mubr.f32.gmra.mrb[0].mxu0 %v169
        %v377 = vpop.f32.mrb[0].mxu0
        %v378 = vadd.f32 0.0, %v377
        %v379 = vpop.f32.mrb[0].mxu0
        %380 = vmatprep.mubr.f32.mxu0 0.0
        %381 = vmatmul.mubr.f32.gmra.mrb[0].mxu0 %v170
        %v382 = vpop.f32.mrb[0].mxu0
        %v383 = vadd.f32 0.0, %v382
        %v384 = vpop.f32.mrb[0].mxu0
        %385 = vdwg.mxu0
        %v386 = vadd.f32 %v383, 0.0
        %v387 = vlaneseq
        %v388 = vshrl.u32 %v387, 7
        %v389 = vsub.s32 1, %v388
        %v390 = vrot.slane %v153, %v389
        %vm391 = vcmp.eq.s32.totalorder %v172, %v390
        %vm392 = vcmp.eq.s32.totalorder %v173, %v390
        %vm393 = vcmp.eq.s32.totalorder %v174, %v390
        %vm394 = vcmp.eq.s32.totalorder %v175, %v390
        %vm395 = vcmp.eq.s32.totalorder %v176, %v390
        %vm396 = vcmp.eq.s32.totalorder %v177, %v390
        %vm397 = vcmp.eq.s32.totalorder %v178, %v390
        %vm398 = vcmp.eq.s32.totalorder %v179, %v390
        %vm399 = vcmp.eq.s32.totalorder %v180, %v390
        %vm400 = vcmp.eq.s32.totalorder %v181, %v390
        %vm401 = vcmp.eq.s32.totalorder %v182, %v390
        %vm402 = vcmp.eq.s32.totalorder %v183, %v390
        %vm403 = vcmp.eq.s32.totalorder %v184, %v390
        %vm404 = vcmp.eq.s32.totalorder %v185, %v390
        %vm405 = vcmp.eq.s32.totalorder %v186, %v390
        %vm406 = vcmp.eq.s32.totalorder %v187, %v390
        %v407 = vsel %vm391, 1, 0
        %v408 = vsel %vm392, 1, 0
        %v409 = vsel %vm393, 1, 0
        %v410 = vsel %vm394, 1, 0
        %v411 = vsel %vm395, 1, 0
        %v412 = vsel %vm396, 1, 0
        %v413 = vsel %vm397, 1, 0
        %v414 = vsel %vm398, 1, 0
        %v415 = vsel %vm399, 1, 0
        %v416 = vsel %vm400, 1, 0
        %v417 = vsel %vm401, 1, 0
        %v418 = vsel %vm402, 1, 0
        %v419 = vsel %vm403, 1, 0
        %v420 = vsel %vm404, 1, 0
        %v421 = vsel %vm405, 1, 0
        %v422 = vsel %vm406, 1, 0
        %v423 = vcvt.s32.f32 %v407
        %v424 = vcvt.s32.f32 %v408
        %v425 = vcvt.s32.f32 %v409
        %v426 = vcvt.s32.f32 %v410
        %v427 = vcvt.s32.f32 %v411
        %v428 = vcvt.s32.f32 %v412
        %v429 = vcvt.s32.f32 %v413
        %v430 = vcvt.s32.f32 %v414
        %v431 = vcvt.s32.f32 %v415
        %v432 = vcvt.s32.f32 %v416
        %v433 = vcvt.s32.f32 %v417
        %v434 = vcvt.s32.f32 %v418
        %v435 = vcvt.s32.f32 %v419
        %v436 = vcvt.s32.f32 %v420
        %v437 = vcvt.s32.f32 %v421
        %v438 = vcvt.s32.f32 %v422
        %439 = vmatprep.subr.mxu0 0.0
        %440 = vmatpush1.msra.mxu0 %v423
        %441 = vmatprep.subr.mxu0 0.0
        %442 = vmatpush1.msra.mxu0 %v424
        %443 = vmatprep.subr.mxu0 0.0
        %444 = vmatpush1.msra.mxu0 %v425
        %445 = vmatprep.subr.mxu0 0.0
        %446 = vmatpush1.msra.mxu0 %v426
        %447 = vmatprep.subr.mxu0 0.0
        %448 = vmatpush1.msra.mxu0 %v427
        %449 = vmatprep.subr.mxu0 0.0
        %450 = vmatpush1.msra.mxu0 %v428
        %451 = vmatprep.subr.mxu0 0.0
        %452 = vmatpush1.msra.mxu0 %v429
        %453 = vmatprep.subr.mxu0 0.0
        %454 = vmatpush1.msra.mxu0 %v430
        %455 = vmatprep.subr.mxu0 0.0
        %456 = vmatpush1.msra.mxu0 %v431
        %457 = vmatprep.subr.mxu0 0.0
        %458 = vmatpush1.msra.mxu0 %v432
        %459 = vmatprep.subr.mxu0 0.0
        %460 = vmatpush1.msra.mxu0 %v433
        %461 = vmatprep.subr.mxu0 0.0
        %462 = vmatpush1.msra.mxu0 %v434
        %463 = vmatprep.subr.mxu0 0.0
        %464 = vmatpush1.msra.mxu0 %v435
        %465 = vmatprep.subr.mxu0 0.0
        %466 = vmatpush1.msra.mxu0 %v436
        %467 = vmatprep.subr.mxu0 0.0
        %468 = vmatpush1.msra.mxu0 %v437
        %469 = vmatprep.subr.mxu0 0.0
        %470 = vmatpush1.msra.mxu0 %v438
        %471 = vmatprep.subr.mxu0 0.0
        %472 = vmatpush1.msra.mxu0 0.0
        %473 = vmatprep.subr.mxu0 0.0
        %474 = vmatpush1.msra.mxu0 0.0
        %475 = vmatprep.subr.mxu0 0.0
        %476 = vmatpush1.msra.mxu0 0.0
        %477 = vmatprep.subr.mxu0 0.0
        %478 = vmatpush1.msra.mxu0 0.0
        %479 = vmatprep.subr.mxu0 0.0
        %480 = vmatpush1.msra.mxu0 0.0
        %481 = vmatprep.subr.mxu0 0.0
        %482 = vmatpush1.msra.mxu0 0.0
        %483 = vmatprep.subr.mxu0 0.0
        %484 = vmatpush1.msra.mxu0 0.0
        %485 = vmatprep.subr.mxu0 0.0
        %486 = vmatpush1.msra.mxu0 0.0
        %487 = vmatprep.subr.mxu0 0.0
        %488 = vmatpush1.msra.mxu0 0.0
        %489 = vmatprep.subr.mxu0 0.0
        %490 = vmatpush1.msra.mxu0 0.0
        %491 = vmatprep.subr.mxu0 0.0
        %492 = vmatpush1.msra.mxu0 0.0
        %493 = vmatprep.subr.mxu0 0.0
        %494 = vmatpush1.msra.mxu0 0.0
        %495 = vmatprep.subr.mxu0 0.0
        %496 = vmatpush1.msra.mxu0 0.0
        %497 = vmatprep.subr.mxu0 0.0
        %498 = vmatpush1.msra.mxu0 0.0
        %499 = vmatprep.subr.mxu0 0.0
        %500 = vmatpush1.msra.mxu0 0.0
        %501 = vmatprep.subr.mxu0 0.0
        %502 = vmatpush1.msra.mxu0 0.0
        %503 = vmatprep.mubr.f32.mxu0 0.0
        %504 = vmatmul.mubr.f32.gmra.mrb[0].mxu0 %v154
        %v505 = vpop.f32.mrb[0].mxu0
        %v506 = vadd.f32 0.0, %v505
        %v507 = vpop.f32.mrb[0].mxu0
        %508 = vmatprep.mubr.f32.mxu0 0.0
        %509 = vmatmul.mubr.f32.gmra.mrb[0].mxu0 %v155
        %v510 = vpop.f32.mrb[0].mxu0
        %v511 = vadd.f32 0.0, %v510
        %v512 = vpop.f32.mrb[0].mxu0
        %513 = vmatprep.mubr.f32.mxu0 0.0
        %514 = vmatmul.mubr.f32.gmra.mrb[0].mxu0 %v156
        %v515 = vpop.f32.mrb[0].mxu0
        %v516 = vadd.f32 0.0, %v515
        %v517 = vpop.f32.mrb[0].mxu0
        %518 = vmatprep.mubr.f32.mxu0 0.0
        %519 = vmatmul.mubr.f32.gmra.mrb[0].mxu0 %v157
        %v520 = vpop.f32.mrb[0].mxu0
        %v521 = vadd.f32 0.0, %v520
        %v522 = vpop.f32.mrb[0].mxu0
        %523 = vmatprep.mubr.f32.mxu0 0.0
        %524 = vmatmul.mubr.f32.gmra.mrb[0].mxu0 %v158
        %v525 = vpop.f32.mrb[0].mxu0
        %v526 = vpop.f32.mrb[0].mxu0
        %527 = vmatprep.mubr.f32.mxu0 0.0
        %528 = vmatmul.mubr.f32.gmra.mrb[0].mxu0 %v159
        %v529 = vpop.f32.mrb[0].mxu0
        %v530 = vpop.f32.mrb[0].mxu0
        %531 = vmatprep.mubr.f32.mxu0 0.0
        %532 = vmatmul.mubr.f32.gmra.mrb[0].mxu0 %v160
        %v533 = vpop.f32.mrb[0].mxu0
        %v534 = vpop.f32.mrb[0].mxu0
        %535 = vmatprep.mubr.f32.mxu0 0.0
        %536 = vmatmul.mubr.f32.gmra.mrb[0].mxu0 %v161
        %v537 = vpop.f32.mrb[0].mxu0
        %v538 = vpop.f32.mrb[0].mxu0
        %539 = vmatprep.mubr.f32.mxu0 0.0
        %540 = vmatmul.mubr.f32.gmra.mrb[0].mxu0 %v162
        %v541 = vpop.f32.mrb[0].mxu0
        %v542 = vadd.f32 0.0, %v541
        %v543 = vpop.f32.mrb[0].mxu0
        %544 = vmatprep.mubr.f32.mxu0 0.0
        %545 = vmatmul.mubr.f32.gmra.mrb[0].mxu0 %v163
        %v546 = vpop.f32.mrb[0].mxu0
        %v547 = vadd.f32 0.0, %v546
        %v548 = vpop.f32.mrb[0].mxu0
        %549 = vmatprep.mubr.f32.mxu0 0.0
        %550 = vmatmul.mubr.f32.gmra.mrb[0].mxu0 %v164
        %v551 = vpop.f32.mrb[0].mxu0
        %v552 = vadd.f32 0.0, %v551
        %v553 = vpop.f32.mrb[0].mxu0
        %554 = vmatprep.mubr.f32.mxu0 0.0
        %555 = vmatmul.mubr.f32.gmra.mrb[0].mxu0 %v165
        %v556 = vpop.f32.mrb[0].mxu0
        %v557 = vadd.f32 0.0, %v556
        %v558 = vpop.f32.mrb[0].mxu0
        %559 = vmatprep.mubr.f32.mxu0 0.0
        %560 = vmatmul.mubr.f32.gmra.mrb[0].mxu0 %v166
        %v561 = vpop.f32.mrb[0].mxu0
        %v562 = vadd.f32 0.0, %v561
        %v563 = vpop.f32.mrb[0].mxu0
        %564 = vmatprep.mubr.f32.mxu0 0.0
        %565 = vmatmul.mubr.f32.gmra.mrb[0].mxu0 %v167
        %v566 = vpop.f32.mrb[0].mxu0
        %v567 = vadd.f32 0.0, %v566
        %v568 = vpop.f32.mrb[0].mxu0
        %569 = vmatprep.mubr.f32.mxu0 0.0
        %570 = vmatmul.mubr.f32.gmra.mrb[0].mxu0 %v168
        %v571 = vpop.f32.mrb[0].mxu0
        %v572 = vadd.f32 0.0, %v571
        %v573 = vpop.f32.mrb[0].mxu0
        %574 = vmatprep.mubr.f32.mxu0 0.0
        %575 = vmatmul.mubr.f32.gmra.mrb[0].mxu0 %v169
        %v576 = vpop.f32.mrb[0].mxu0
        %v577 = vadd.f32 0.0, %v576
        %v578 = vpop.f32.mrb[0].mxu0
        %579 = vmatprep.mubr.f32.mxu0 0.0
        %580 = vmatmul.mubr.f32.gmra.mrb[0].mxu0 %v170
        %v581 = vpop.f32.mrb[0].mxu0
        %v582 = vadd.f32 0.0, %v581
        %v583 = vpop.f32.mrb[0].mxu0
        %584 = vdwg.mxu0
        %v585 = vadd.f32 %v386, %v582
        %v586 = vlaneseq
        %v587 = vshrl.u32 %v586, 7
        %v588 = vsub.s32 2, %v587
        %v589 = vrot.slane %v153, %v588
        %vm590 = vcmp.eq.s32.totalorder %v172, %v589
        %vm591 = vcmp.eq.s32.totalorder %v173, %v589
        %vm592 = vcmp.eq.s32.totalorder %v174, %v589
        %vm593 = vcmp.eq.s32.totalorder %v175, %v589
        %vm594 = vcmp.eq.s32.totalorder %v176, %v589
        %vm595 = vcmp.eq.s32.totalorder %v177, %v589
        %vm596 = vcmp.eq.s32.totalorder %v178, %v589
        %vm597 = vcmp.eq.s32.totalorder %v179, %v589
        %vm598 = vcmp.eq.s32.totalorder %v180, %v589
        %vm599 = vcmp.eq.s32.totalorder %v181, %v589
        %vm600 = vcmp.eq.s32.totalorder %v182, %v589
        %vm601 = vcmp.eq.s32.totalorder %v183, %v589
        %vm602 = vcmp.eq.s32.totalorder %v184, %v589
        %vm603 = vcmp.eq.s32.totalorder %v185, %v589
        %vm604 = vcmp.eq.s32.totalorder %v186, %v589
        %vm605 = vcmp.eq.s32.totalorder %v187, %v589
        %v606 = vsel %vm590, 1, 0
        %v607 = vsel %vm591, 1, 0
        %v608 = vsel %vm592, 1, 0
        %v609 = vsel %vm593, 1, 0
        %v610 = vsel %vm594, 1, 0
        %v611 = vsel %vm595, 1, 0
        %v612 = vsel %vm596, 1, 0
        %v613 = vsel %vm597, 1, 0
        %v614 = vsel %vm598, 1, 0
        %v615 = vsel %vm599, 1, 0
        %v616 = vsel %vm600, 1, 0
        %v617 = vsel %vm601, 1, 0
        %v618 = vsel %vm602, 1, 0
        %v619 = vsel %vm603, 1, 0
        %v620 = vsel %vm604, 1, 0
        %v621 = vsel %vm605, 1, 0
        %v622 = vcvt.s32.f32 %v606
        %v623 = vcvt.s32.f32 %v607
        %v624 = vcvt.s32.f32 %v608
        %v625 = vcvt.s32.f32 %v609
        %v626 = vcvt.s32.f32 %v610
        %v627 = vcvt.s32.f32 %v611
        %v628 = vcvt.s32.f32 %v612
        %v629 = vcvt.s32.f32 %v613
        %v630 = vcvt.s32.f32 %v614
        %v631 = vcvt.s32.f32 %v615
        %v632 = vcvt.s32.f32 %v616
        %v633 = vcvt.s32.f32 %v617
        %v634 = vcvt.s32.f32 %v618
        %v635 = vcvt.s32.f32 %v619
        %v636 = vcvt.s32.f32 %v620
        %v637 = vcvt.s32.f32 %v621
        %638 = vmatprep.subr.mxu0 0.0
        %639 = vmatpush1.msra.mxu0 %v622
        %640 = vmatprep.subr.mxu0 0.0
        %641 = vmatpush1.msra.mxu0 %v623
        %642 = vmatprep.subr.mxu0 0.0
        %643 = vmatpush1.msra.mxu0 %v624
        %644 = vmatprep.subr.mxu0 0.0
        %645 = vmatpush1.msra.mxu0 %v625
        %646 = vmatprep.subr.mxu0 0.0
        %647 = vmatpush1.msra.mxu0 %v626
        %648 = vmatprep.subr.mxu0 0.0
        %649 = vmatpush1.msra.mxu0 %v627
        %650 = vmatprep.subr.mxu0 0.0
        %651 = vmatpush1.msra.mxu0 %v628
        %652 = vmatprep.subr.mxu0 0.0
        %653 = vmatpush1.msra.mxu0 %v629
        %654 = vmatprep.subr.mxu0 0.0
        %655 = vmatpush1.msra.mxu0 %v630
        %656 = vmatprep.subr.mxu0 0.0
        %657 = vmatpush1.msra.mxu0 %v631
        %658 = vmatprep.subr.mxu0 0.0
        %659 = vmatpush1.msra.mxu0 %v632
        %660 = vmatprep.subr.mxu0 0.0
        %661 = vmatpush1.msra.mxu0 %v633
        %662 = vmatprep.subr.mxu0 0.0
        %663 = vmatpush1.msra.mxu0 %v634
        %664 = vmatprep.subr.mxu0 0.0
        %665 = vmatpush1.msra.mxu0 %v635
        %666 = vmatprep.subr.mxu0 0.0
        %667 = vmatpush1.msra.mxu0 %v636
        %668 = vmatprep.subr.mxu0 0.0
        %669 = vmatpush1.msra.mxu0 %v637
        %670 = vmatprep.subr.mxu0 0.0
        %671 = vmatpush1.msra.mxu0 0.0
        %672 = vmatprep.subr.mxu0 0.0
        %673 = vmatpush1.msra.mxu0 0.0
        %674 = vmatprep.subr.mxu0 0.0
        %675 = vmatpush1.msra.mxu0 0.0
        %676 = vmatprep.subr.mxu0 0.0
        %677 = vmatpush1.msra.mxu0 0.0
        %678 = vmatprep.subr.mxu0 0.0
        %679 = vmatpush1.msra.mxu0 0.0
        %680 = vmatprep.subr.mxu0 0.0
        %681 = vmatpush1.msra.mxu0 0.0
        %682 = vmatprep.subr.mxu0 0.0
        %683 = vmatpush1.msra.mxu0 0.0
        %684 = vmatprep.subr.mxu0 0.0
        %685 = vmatpush1.msra.mxu0 0.0
        %686 = vmatprep.subr.mxu0 0.0
        %687 = vmatpush1.msra.mxu0 0.0
        %688 = vmatprep.subr.mxu0 0.0
        %689 = vmatpush1.msra.mxu0 0.0
        %690 = vmatprep.subr.mxu0 0.0
        %691 = vmatpush1.msra.mxu0 0.0
        %692 = vmatprep.subr.mxu0 0.0
        %693 = vmatpush1.msra.mxu0 0.0
        %694 = vmatprep.subr.mxu0 0.0
        %695 = vmatpush1.msra.mxu0 0.0
        %696 = vmatprep.subr.mxu0 0.0
        %697 = vmatpush1.msra.mxu0 0.0
        %698 = vmatprep.subr.mxu0 0.0
        %699 = vmatpush1.msra.mxu0 0.0
        %700 = vmatprep.subr.mxu0 0.0
        %701 = vmatpush1.msra.mxu0 0.0
        %702 = vmatprep.mubr.f32.mxu0 0.0
        %703 = vmatmul.mubr.f32.gmra.mrb[0].mxu0 %v154
        %v704 = vpop.f32.mrb[0].mxu0
        %v705 = vadd.f32 0.0, %v704
        %v706 = vpop.f32.mrb[0].mxu0
        %707 = vmatprep.mubr.f32.mxu0 0.0
        %708 = vmatmul.mubr.f32.gmra.mrb[0].mxu0 %v155
        %v709 = vpop.f32.mrb[0].mxu0
        %v710 = vadd.f32 0.0, %v709
        %v711 = vpop.f32.mrb[0].mxu0
        %712 = vmatprep.mubr.f32.mxu0 0.0
        %713 = vmatmul.mubr.f32.gmra.mrb[0].mxu0 %v156
        %v714 = vpop.f32.mrb[0].mxu0
        %v715 = vadd.f32 0.0, %v714
        %v716 = vpop.f32.mrb[0].mxu0
        %717 = vmatprep.mubr.f32.mxu0 0.0
        %718 = vmatmul.mubr.f32.gmra.mrb[0].mxu0 %v157
        %v719 = vpop.f32.mrb[0].mxu0
        %v720 = vadd.f32 0.0, %v719
        %v721 = vpop.f32.mrb[0].mxu0
        %722 = vmatprep.mubr.f32.mxu0 0.0
        %723 = vmatmul.mubr.f32.gmra.mrb[0].mxu0 %v158
        %v724 = vpop.f32.mrb[0].mxu0
        %v725 = vadd.f32 0.0, %v724
        %v726 = vpop.f32.mrb[0].mxu0
        %727 = vmatprep.mubr.f32.mxu0 0.0
        %728 = vmatmul.mubr.f32.gmra.mrb[0].mxu0 %v159
        %v729 = vpop.f32.mrb[0].mxu0
        %v730 = vadd.f32 0.0, %v729
        %v731 = vpop.f32.mrb[0].mxu0
        %732 = vmatprep.mubr.f32.mxu0 0.0
        %733 = vmatmul.mubr.f32.gmra.mrb[0].mxu0 %v160
        %v734 = vpop.f32.mrb[0].mxu0
        %v735 = vadd.f32 0.0, %v734
        %v736 = vpop.f32.mrb[0].mxu0
        %737 = vmatprep.mubr.f32.mxu0 0.0
        %738 = vmatmul.mubr.f32.gmra.mrb[0].mxu0 %v161
        %v739 = vpop.f32.mrb[0].mxu0
        %v740 = vadd.f32 0.0, %v739
        %v741 = vpop.f32.mrb[0].mxu0
        %742 = vmatprep.mubr.f32.mxu0 0.0
        %743 = vmatmul.mubr.f32.gmra.mrb[0].mxu0 %v162
        %v744 = vpop.f32.mrb[0].mxu0
        %v745 = vpop.f32.mrb[0].mxu0
        %746 = vmatprep.mubr.f32.mxu0 0.0
        %747 = vmatmul.mubr.f32.gmra.mrb[0].mxu0 %v163
        %v748 = vpop.f32.mrb[0].mxu0
        %v749 = vpop.f32.mrb[0].mxu0
        %750 = vmatprep.mubr.f32.mxu0 0.0
        %751 = vmatmul.mubr.f32.gmra.mrb[0].mxu0 %v164
        %v752 = vpop.f32.mrb[0].mxu0
        %v753 = vpop.f32.mrb[0].mxu0
        %754 = vmatprep.mubr.f32.mxu0 0.0
        %755 = vmatmul.mubr.f32.gmra.mrb[0].mxu0 %v165
        %v756 = vpop.f32.mrb[0].mxu0
        %v757 = vpop.f32.mrb[0].mxu0
        %758 = vmatprep.mubr.f32.mxu0 0.0
        %759 = vmatmul.mubr.f32.gmra.mrb[0].mxu0 %v166
        %v760 = vpop.f32.mrb[0].mxu0
        %v761 = vadd.f32 0.0, %v760
        %v762 = vpop.f32.mrb[0].mxu0
        %763 = vmatprep.mubr.f32.mxu0 0.0
        %764 = vmatmul.mubr.f32.gmra.mrb[0].mxu0 %v167
        %v765 = vpop.f32.mrb[0].mxu0
        %v766 = vadd.f32 0.0, %v765
        %v767 = vpop.f32.mrb[0].mxu0
        %768 = vmatprep.mubr.f32.mxu0 0.0
        %769 = vmatmul.mubr.f32.gmra.mrb[0].mxu0 %v168
        %v770 = vpop.f32.mrb[0].mxu0
        %v771 = vadd.f32 0.0, %v770
        %v772 = vpop.f32.mrb[0].mxu0
        %773 = vmatprep.mubr.f32.mxu0 0.0
        %774 = vmatmul.mubr.f32.gmra.mrb[0].mxu0 %v169
        %v775 = vpop.f32.mrb[0].mxu0
        %v776 = vadd.f32 0.0, %v775
        %v777 = vpop.f32.mrb[0].mxu0
        %778 = vmatprep.mubr.f32.mxu0 0.0
        %779 = vmatmul.mubr.f32.gmra.mrb[0].mxu0 %v170
        %v780 = vpop.f32.mrb[0].mxu0
        %v781 = vadd.f32 0.0, %v780
        %v782 = vpop.f32.mrb[0].mxu0
        %783 = vdwg.mxu0
        %v784 = vadd.f32 %v585, %v781
        %v785 = vlaneseq
        %v786 = vshrl.u32 %v785, 7
        %v787 = vsub.s32 3, %v786
        %v788 = vrot.slane %v153, %v787
        %vm789 = vcmp.eq.s32.totalorder %v172, %v788
        %vm790 = vcmp.eq.s32.totalorder %v173, %v788
        %vm791 = vcmp.eq.s32.totalorder %v174, %v788
        %vm792 = vcmp.eq.s32.totalorder %v175, %v788
        %vm793 = vcmp.eq.s32.totalorder %v176, %v788
        %vm794 = vcmp.eq.s32.totalorder %v177, %v788
        %vm795 = vcmp.eq.s32.totalorder %v178, %v788
        %vm796 = vcmp.eq.s32.totalorder %v179, %v788
        %vm797 = vcmp.eq.s32.totalorder %v180, %v788
        %vm798 = vcmp.eq.s32.totalorder %v181, %v788
        %vm799 = vcmp.eq.s32.totalorder %v182, %v788
        %vm800 = vcmp.eq.s32.totalorder %v183, %v788
        %vm801 = vcmp.eq.s32.totalorder %v184, %v788
        %vm802 = vcmp.eq.s32.totalorder %v185, %v788
        %vm803 = vcmp.eq.s32.totalorder %v186, %v788
        %vm804 = vcmp.eq.s32.totalorder %v187, %v788
        %v805 = vsel %vm789, 1, 0
        %v806 = vsel %vm790, 1, 0
        %v807 = vsel %vm791, 1, 0
        %v808 = vsel %vm792, 1, 0
        %v809 = vsel %vm793, 1, 0
        %v810 = vsel %vm794, 1, 0
        %v811 = vsel %vm795, 1, 0
        %v812 = vsel %vm796, 1, 0
        %v813 = vsel %vm797, 1, 0
        %v814 = vsel %vm798, 1, 0
        %v815 = vsel %vm799, 1, 0
        %v816 = vsel %vm800, 1, 0
        %v817 = vsel %vm801, 1, 0
        %v818 = vsel %vm802, 1, 0
        %v819 = vsel %vm803, 1, 0
        %v820 = vsel %vm804, 1, 0
        %v821 = vcvt.s32.f32 %v805
        %v822 = vcvt.s32.f32 %v806
        %v823 = vcvt.s32.f32 %v807
        %v824 = vcvt.s32.f32 %v808
        %v825 = vcvt.s32.f32 %v809
        %v826 = vcvt.s32.f32 %v810
        %v827 = vcvt.s32.f32 %v811
        %v828 = vcvt.s32.f32 %v812
        %v829 = vcvt.s32.f32 %v813
        %v830 = vcvt.s32.f32 %v814
        %v831 = vcvt.s32.f32 %v815
        %v832 = vcvt.s32.f32 %v816
        %v833 = vcvt.s32.f32 %v817
        %v834 = vcvt.s32.f32 %v818
        %v835 = vcvt.s32.f32 %v819
        %v836 = vcvt.s32.f32 %v820
        %837 = vmatprep.subr.mxu0 0.0
        %838 = vmatpush1.msra.mxu0 %v821
        %839 = vmatprep.subr.mxu0 0.0
        %840 = vmatpush1.msra.mxu0 %v822
        %841 = vmatprep.subr.mxu0 0.0
        %842 = vmatpush1.msra.mxu0 %v823
        %843 = vmatprep.subr.mxu0 0.0
        %844 = vmatpush1.msra.mxu0 %v824
        %845 = vmatprep.subr.mxu0 0.0
        %846 = vmatpush1.msra.mxu0 %v825
        %847 = vmatprep.subr.mxu0 0.0
        %848 = vmatpush1.msra.mxu0 %v826
        %849 = vmatprep.subr.mxu0 0.0
        %850 = vmatpush1.msra.mxu0 %v827
        %851 = vmatprep.subr.mxu0 0.0
        %852 = vmatpush1.msra.mxu0 %v828
        %853 = vmatprep.subr.mxu0 0.0
        %854 = vmatpush1.msra.mxu0 %v829
        %855 = vmatprep.subr.mxu0 0.0
        %856 = vmatpush1.msra.mxu0 %v830
        %857 = vmatprep.subr.mxu0 0.0
        %858 = vmatpush1.msra.mxu0 %v831
        %859 = vmatprep.subr.mxu0 0.0
        %860 = vmatpush1.msra.mxu0 %v832
        %861 = vmatprep.subr.mxu0 0.0
        %862 = vmatpush1.msra.mxu0 %v833
        %863 = vmatprep.subr.mxu0 0.0
        %864 = vmatpush1.msra.mxu0 %v834
        %865 = vmatprep.subr.mxu0 0.0
        %866 = vmatpush1.msra.mxu0 %v835
        %867 = vmatprep.subr.mxu0 0.0
        %868 = vmatpush1.msra.mxu0 %v836
        %869 = vmatprep.subr.mxu0 0.0
        %870 = vmatpush1.msra.mxu0 0.0
        %871 = vmatprep.subr.mxu0 0.0
        %872 = vmatpush1.msra.mxu0 0.0
        %873 = vmatprep.subr.mxu0 0.0
        %874 = vmatpush1.msra.mxu0 0.0
        %875 = vmatprep.subr.mxu0 0.0
        %876 = vmatpush1.msra.mxu0 0.0
        %877 = vmatprep.subr.mxu0 0.0
        %878 = vmatpush1.msra.mxu0 0.0
        %879 = vmatprep.subr.mxu0 0.0
        %880 = vmatpush1.msra.mxu0 0.0
        %881 = vmatprep.subr.mxu0 0.0
        %882 = vmatpush1.msra.mxu0 0.0
        %883 = vmatprep.subr.mxu0 0.0
        %884 = vmatpush1.msra.mxu0 0.0
        %885 = vmatprep.subr.mxu0 0.0
        %886 = vmatpush1.msra.mxu0 0.0
        %887 = vmatprep.subr.mxu0 0.0
        %888 = vmatpush1.msra.mxu0 0.0
        %889 = vmatprep.subr.mxu0 0.0
        %890 = vmatpush1.msra.mxu0 0.0
        %891 = vmatprep.subr.mxu0 0.0
        %892 = vmatpush1.msra.mxu0 0.0
        %893 = vmatprep.subr.mxu0 0.0
        %894 = vmatpush1.msra.mxu0 0.0
        %895 = vmatprep.subr.mxu0 0.0
        %896 = vmatpush1.msra.mxu0 0.0
        %897 = vmatprep.subr.mxu0 0.0
        %898 = vmatpush1.msra.mxu0 0.0
        %899 = vmatprep.subr.mxu0 0.0
        %900 = vmatpush1.msra.mxu0 0.0
        %901 = vmatprep.mubr.f32.mxu0 0.0
        %902 = vmatmul.mubr.f32.gmra.mrb[0].mxu0 %v154
        %v903 = vpop.f32.mrb[0].mxu0
        %v904 = vadd.f32 0.0, %v903
        %v905 = vpop.f32.mrb[0].mxu0
        %906 = vmatprep.mubr.f32.mxu0 0.0
        %907 = vmatmul.mubr.f32.gmra.mrb[0].mxu0 %v155
        %v908 = vpop.f32.mrb[0].mxu0
        %v909 = vadd.f32 0.0, %v908
        %v910 = vpop.f32.mrb[0].mxu0
        %911 = vmatprep.mubr.f32.mxu0 0.0
        %912 = vmatmul.mubr.f32.gmra.mrb[0].mxu0 %v156
        %v913 = vpop.f32.mrb[0].mxu0
        %v914 = vadd.f32 0.0, %v913
        %v915 = vpop.f32.mrb[0].mxu0
        %916 = vmatprep.mubr.f32.mxu0 0.0
        %917 = vmatmul.mubr.f32.gmra.mrb[0].mxu0 %v157
        %v918 = vpop.f32.mrb[0].mxu0
        %v919 = vadd.f32 0.0, %v918
        %v920 = vpop.f32.mrb[0].mxu0
        %921 = vmatprep.mubr.f32.mxu0 0.0
        %922 = vmatmul.mubr.f32.gmra.mrb[0].mxu0 %v158
        %v923 = vpop.f32.mrb[0].mxu0
        %v924 = vadd.f32 0.0, %v923
        %v925 = vpop.f32.mrb[0].mxu0
        %926 = vmatprep.mubr.f32.mxu0 0.0
        %927 = vmatmul.mubr.f32.gmra.mrb[0].mxu0 %v159
        %v928 = vpop.f32.mrb[0].mxu0
        %v929 = vadd.f32 0.0, %v928
        %v930 = vpop.f32.mrb[0].mxu0
        %931 = vmatprep.mubr.f32.mxu0 0.0
        %932 = vmatmul.mubr.f32.gmra.mrb[0].mxu0 %v160
        %v933 = vpop.f32.mrb[0].mxu0
        %v934 = vadd.f32 0.0, %v933
        %v935 = vpop.f32.mrb[0].mxu0
        %936 = vmatprep.mubr.f32.mxu0 0.0
        %937 = vmatmul.mubr.f32.gmra.mrb[0].mxu0 %v161
        %v938 = vpop.f32.mrb[0].mxu0
        %v939 = vadd.f32 0.0, %v938
        %v940 = vpop.f32.mrb[0].mxu0
        %941 = vmatprep.mubr.f32.mxu0 0.0
        %942 = vmatmul.mubr.f32.gmra.mrb[0].mxu0 %v162
        %v943 = vpop.f32.mrb[0].mxu0
        %v944 = vadd.f32 0.0, %v943
        %v945 = vpop.f32.mrb[0].mxu0
        %946 = vmatprep.mubr.f32.mxu0 0.0
        %947 = vmatmul.mubr.f32.gmra.mrb[0].mxu0 %v163
        %v948 = vpop.f32.mrb[0].mxu0
        %v949 = vadd.f32 0.0, %v948
        %v950 = vpop.f32.mrb[0].mxu0
        %951 = vmatprep.mubr.f32.mxu0 0.0
        %952 = vmatmul.mubr.f32.gmra.mrb[0].mxu0 %v164
        %v953 = vpop.f32.mrb[0].mxu0
        %v954 = vadd.f32 0.0, %v953
        %v955 = vpop.f32.mrb[0].mxu0
        %956 = vmatprep.mubr.f32.mxu0 0.0
        %957 = vmatmul.mubr.f32.gmra.mrb[0].mxu0 %v165
        %v958 = vpop.f32.mrb[0].mxu0
        %v959 = vadd.f32 0.0, %v958
        %v960 = vpop.f32.mrb[0].mxu0
        %961 = vmatprep.mubr.f32.mxu0 0.0
        %962 = vmatmul.mubr.f32.gmra.mrb[0].mxu0 %v166
        %v963 = vpop.f32.mrb[0].mxu0
        %v964 = vpop.f32.mrb[0].mxu0
        %965 = vmatprep.mubr.f32.mxu0 0.0
        %966 = vmatmul.mubr.f32.gmra.mrb[0].mxu0 %v167
        %v967 = vpop.f32.mrb[0].mxu0
        %v968 = vpop.f32.mrb[0].mxu0
        %969 = vmatprep.mubr.f32.mxu0 0.0
        %970 = vmatmul.mubr.f32.gmra.mrb[0].mxu0 %v168
        %v971 = vpop.f32.mrb[0].mxu0
        %v972 = vpop.f32.mrb[0].mxu0
        %973 = vmatprep.mubr.f32.mxu0 0.0
        %974 = vmatmul.mubr.f32.gmra.mrb[0].mxu0 %v169
        %v975 = vpop.f32.mrb[0].mxu0
        %v976 = vpop.f32.mrb[0].mxu0
        %977 = vmatprep.mubr.f32.mxu0 0.0
        %978 = vmatmul.mubr.f32.gmra.mrb[0].mxu0 %v170
        %v979 = vpop.f32.mrb[0].mxu0
        %v980 = vadd.f32 0.0, %v979
        %v981 = vpop.f32.mrb[0].mxu0
        %982 = vdwg.mxu0
        %v983 = vadd.f32 %v784, %v980
        %v984 = vmul.f32 %v323, %v506
        %v985 = vmul.f32 %v328, %v511
        %v986 = vmul.f32 %v333, %v516
        %v987 = vmul.f32 %v338, %v521
        %v988 = vadd.f32 %v984, 0.0
        %v989 = vadd.f32 %v985, 0.0
        %v990 = vadd.f32 %v986, 0.0
        %v991 = vadd.f32 %v987, 0.0
        %v992 = vmul.f32 %v343, %v705
        %v993 = vmul.f32 %v348, %v710
        %v994 = vmul.f32 %v353, %v715
        %v995 = vmul.f32 %v358, %v720
        %v996 = vadd.f32 %v988, %v992
        %v997 = vadd.f32 %v989, %v993
        %v998 = vadd.f32 %v990, %v994
        %v999 = vadd.f32 %v991, %v995
        %v1000 = vmul.f32 %v363, %v904
        %v1001 = vmul.f32 %v368, %v909
        %v1002 = vmul.f32 %v373, %v914
        %v1003 = vmul.f32 %v378, %v919
        %v1004 = vadd.f32 %v996, %v1000
        %v1005 = vadd.f32 %v997, %v1001
        %v1006 = vadd.f32 %v998, %v1002
        %v1007 = vadd.f32 %v999, %v1003
        %v1008 = vmul.f32 %v542, %v725
        %v1009 = vmul.f32 %v547, %v730
        %v1010 = vmul.f32 %v552, %v735
        %v1011 = vmul.f32 %v557, %v740
        %v1012 = vadd.f32 %v1004, %v1008
        %v1013 = vadd.f32 %v1005, %v1009
        %v1014 = vadd.f32 %v1006, %v1010
        %v1015 = vadd.f32 %v1007, %v1011
        %v1016 = vmul.f32 %v562, %v924
        %v1017 = vmul.f32 %v567, %v929
        %v1018 = vmul.f32 %v572, %v934
        %v1019 = vmul.f32 %v577, %v939
        %v1020 = vadd.f32 %v1012, %v1016
        %v1021 = vadd.f32 %v1013, %v1017
        %v1022 = vadd.f32 %v1014, %v1018
        %v1023 = vadd.f32 %v1015, %v1019
        %v1024 = vmul.f32 %v761, %v944
        %v1025 = vmul.f32 %v766, %v949
        %v1026 = vmul.f32 %v771, %v954
        %v1027 = vmul.f32 %v776, %v959
        %v1028 = vadd.f32 %v1020, %v1024
        %v1029 = vadd.f32 %v1021, %v1025
        %v1030 = vadd.f32 %v1022, %v1026
        %v1031 = vadd.f32 %v1023, %v1027
        %v1032 = vadd.f32 %v1028, %v1029
        %v1033 = vadd.f32 %v1032, %v1030
        %v1034 = vadd.f32 %v1033, %v1031
        %v1035 = vrot.slane %v1034, 4
        %v1036 = vadd.f32 %v1034, %v1035
        %v1037 = vrot.slane %v1036, 2
        %v1038 = vadd.f32 %v1036, %v1037
        %v1039 = vrot.slane %v1038, 1
        %v1040 = vadd.f32 %v1038, %v1039
        %v1041 = vadd.f32 %v1040, %v983
        %v1042 = vxor.u32 %v1041, 2147483648
        %v1043 = vmul.f32 %v1042, 1.442695
        %v1044 = vpow.pop %v1043
        %v1045 = vadd.f32 %v1044, 1.0
        %v1046 = vrcp.pop %v1045
        %v1047 = vmul.f32 1.0, %v1046
        %1048 = vst [vmem:[%s148] sm:$0x1] %v1047
        %s1049 = sand.u32 %s72, 1
        %s1050 = scalar_lea.sflag [#allocation4], %s1049
        %s1051 = sand.u32 %s72, 1
        %s1052 = scalar_lea.vmem [#allocation5], %s1051
        // Predicated region
        $region33: #{ffm_forward.1} parent=27 // pred_check
          %p1053 = pneg %p82
        $region34: #{ffm_forward.1} parent=27 // pred_check_branch
          %1055 = sbr.rel (%p1053) target = $region36
        $region35: #{ffm_forward.1} parent=27 // pred_region
          %s1057 = ssub.s32 16, 16
          %1058 = vsyncadd %s1050, %s1057
          %s1059 = smul.addr %s17, 16
          %s1060 = scalar_lea.hbm %s2, %s1059
          %s1062 = sshll.u32 %s1052, 4
          %s1063 = int_to_ptr.vmem [resolvable:$true] %s1062
          %1065 = dma.vmem_to_hbm [thread:$0]  %s1063, 16, %s1060, %s1050
        $region36: #{ffm_forward.1} parent=27 // pred_fallthru
          _
      $region28: #{ffm_forward.1} parent=5 // pred_fallthru
        _
      %p1066 = scmp.le.s32.totalorder 2, %s12
      // Predicated region
      $region37: #{ffm_forward.1} parent=5 // pred_check
        %p1067 = pneg %p1066
      $region38: #{ffm_forward.1} parent=5 // pred_check_branch
        %1069 = sbr.rel (%p1067) target = $region40
      $region39: #{ffm_forward.1} parent=5 // pred_region
        %s1070 = ssub.s32 %s12, 2
        // Predicated region
        $region41: #{ffm_forward.1} parent=39 // pred_check
          %p1071 = pneg %p88
        $region42: #{ffm_forward.1} parent=39 // pred_check_branch
          %1073 = sbr.rel (%p1071) target = $region44
        $region43: #{ffm_forward.1} parent=39 // pred_region
          %s1074 = sand.u32 %s73, 1
          %s1075 = scalar_lea.sflag [#allocation4], %s1074
          %s1076 = sand.u32 %s73, 1
          %s1077 = scalar_lea.vmem [#allocation5], %s1076
          %1078 = dma.done %s1075, 16
        $region44: #{ffm_forward.1} parent=39 // pred_fallthru
          _
      $region40: #{ffm_forward.1} parent=5 // pred_fallthru
        _
    $region6: #{ffm_forward.1} parent=1 // loop_footer
      %s16 = sadd.s32 1, %s12
    $region7: #{ffm_forward.1} parent=1 // loop_footer_branch
      %11 = sbr.rel target = $region3
    $region8: #{ffm_forward.1} parent=1 // loop_exit
      _
    %1079 = vsyncpa [#allocation3], 1
    %s1080 = scalar_lea.sflag [#allocation3], 1
    %1081 = vsyncpa %s1080, 1
    %1082 = vsyncpa [#allocation4], 1
    %s1083 = scalar_lea.sflag [#allocation4], 1
    %1084 = vsyncpa %s1083, 1

</llo_original>
